<compile_context>
chip_gen: v7x
topology: tpu7x:2x2x1
jax: 0.10.0
libtpu: 0.0.40
codegen_flags: <defaults>
</compile_context>

<pallas_src>
import math

import jax
import jax.numpy as jnp
from jax.experimental import pallas as pl
from jax.experimental.pallas import tpu as pltpu

LN_EPS = 1e-5  # torch.nn.LayerNorm default


def _cdiv(a, b):
    return (a + b - 1) // b


def _round_up(a, b):
    return _cdiv(a, b) * b


def _make_merge_ln_kernel(*, window, C, inv_c, compute_dtype, has_mask):
    def kernel(*refs):
        if has_mask:
            m_ref, x_ref, w_ref, b_ref, g_ref, beta_ref, o_ref = refs
        else:
            x_ref, w_ref, b_ref, g_ref, beta_ref, o_ref = refs

        x = x_ref[...]                                    # [TM, window*C] f32
        if has_mask:
            m = m_ref[...]                                # [TM, window] f32 (0/1)
            # Zero masked tokens: chunk j (lanes j*C..(j+1)*C) scaled by m[:, j].
            parts = [x[:, j * C:(j + 1) * C] * m[:, j:j + 1] for j in range(window)]
            x = jnp.concatenate(parts, axis=-1)

        xc = x.astype(compute_dtype)                      # bf16 just before the MXU
        y = jnp.dot(xc, w_ref[...], preferred_element_type=jnp.float32)
        y = y + b_ref[...]

        # LayerNorm epilogue (f32): gamma folded into the rsqrt scale.
        mean = jnp.sum(y, axis=-1, keepdims=True) * inv_c
        cent = y - mean
        var = jnp.sum(cent * cent, axis=-1, keepdims=True) * inv_c
        scale = jax.lax.rsqrt(var + LN_EPS) * g_ref[...]
        o_ref[...] = (cent * scale + beta_ref[...]).astype(o_ref.dtype)

    return kernel


def token_merging(x, key_padding_mask, w, b, gamma, beta, window,
                  *, tile_m=2048, compute_dtype=jnp.bfloat16, out_dtype=None):
    """Pallas implementation of TokenMerging.forward.

    x: [B, N, C] float32
    key_padding_mask: [B, N] float32 with -inf at masked tokens, 0 otherwise (or None)
    w: [C, window*C]  (PyTorch Linear weight layout, columns ordered c*window+j)
    b, gamma, beta: [C]
    """
    B, N, C = x.shape
    has_mask = key_padding_mask is not None
    out_dtype = x.dtype if out_dtype is None else out_dtype

    # --- glue (plain JAX, tiny or skipped) -----------------------------------
    padding = (window - N % window) % window
    if padding:
        # Only out-of-kernel pass over x; skipped entirely when N % window == 0.
        x = jnp.pad(x, ((0, 0), (0, padding), (0, 0)))
        if has_mask:
            key_padding_mask = jnp.pad(
                key_padding_mask, ((0, 0), (0, padding)), constant_values=-jnp.inf
            )
    M = (N + padding) // window
    wC = window * C
    R = B * M

    # Copy-free row view of the windowed tokens: row[j*C + c] = x[b, m*window+j, c].
    rows = x.reshape(R, wC)  # stays in the input dtype (f32); cast happens in-kernel

    # PyTorch unfold ordering is channel-major: merged[..., c*window + j].
    # Permute the tiny weight so w_p[j*C + c, o] == w[o, c*window + j].
    w_p = jnp.transpose(w.reshape(C, C, window), (2, 1, 0)).reshape(wC, C)
    w_p = w_p.astype(compute_dtype)
    b2 = b.reshape(1, C).astype(jnp.float32)
    g2 = gamma.reshape(1, C).astype(jnp.float32)
    be2 = beta.reshape(1, C).astype(jnp.float32)

    mask01 = None
    if has_mask:
        # Compact 0/1 mask, [R, window] (HBM traffic ~C x smaller than x).
        mask01 = jnp.where(key_padding_mask == -jnp.inf, 0.0, 1.0)
        mask01 = mask01.astype(jnp.float32).reshape(R, window)

    # --- tile sizing under an explicit VMEM budget (safe on v5e/v6e/v7x) -----
    xbytes = jnp.dtype(x.dtype).itemsize
    cbytes = jnp.dtype(compute_dtype).itemsize
    obytes = jnp.dtype(out_dtype).itemsize

    def step_vmem(tm):
        v = 2 * tm * wC * xbytes                 # double-buffered input row tile
        v += wC * C * cbytes                     # weight: constant index -> fetched once
        v += 2 * tm * C * obytes                 # double-buffered output tile
        if has_mask:
            v += 2 * tm * 128 * 4                # [tm, window] block, lane-padded to 128
        v += 3 * 8 * C * 4                       # bias / gamma / beta (sublane-padded)
        return v

    VMEM_BUDGET = 20 << 20                       # well under v7x's 64 MiB physical VMEM

    if R <= 16:
        tile_m = R                               # single block == full array (layout-legal)
    else:
        tile_m = max(16, (min(tile_m, _round_up(R, 16)) // 16) * 16)
        # v7x megacore: make sure there are >= 2 grid steps to shard.
        tile_m = min(tile_m, _round_up(_cdiv(R, 2), 16))
        while tile_m > 16 and step_vmem(tile_m) > VMEM_BUDGET:
            tile_m = max(16, ((tile_m // 2) // 16) * 16)

    grid = (_cdiv(R, tile_m),)
    vmem_limit = min(max(int(step_vmem(tile_m)) + (4 << 20), 16 << 20), 48 << 20)

    cost = pl.CostEstimate(
        flops=int(2 * R * wC * C),
        transcendentals=int(R),
        bytes_accessed=int(R * wC * xbytes + wC * C * cbytes + R * C * obytes
                           + (R * window * 4 if has_mask else 0) + 3 * C * 4),
    )

    kernel = _make_merge_ln_kernel(window=window, C=C, inv_c=1.0 / C,
                                   compute_dtype=compute_dtype, has_mask=has_mask)

    in_specs = []
    args = []
    if has_mask:
        in_specs.append(pl.BlockSpec((tile_m, window), lambda i: (i, 0)))
        args.append(mask01)
    in_specs += [
        pl.BlockSpec((tile_m, wC), lambda i: (i, 0)),
        pl.BlockSpec((wC, C), lambda i: (0, 0)),
        pl.BlockSpec((1, C), lambda i: (0, 0)),
        pl.BlockSpec((1, C), lambda i: (0, 0)),
        pl.BlockSpec((1, C), lambda i: (0, 0)),
    ]
    args += [rows, w_p, b2, g2, be2]

    out = pl.pallas_call(
        kernel,
        out_shape=jax.ShapeDtypeStruct((R, C), out_dtype),
        grid=grid,
        in_specs=in_specs,
        out_specs=pl.BlockSpec((tile_m, C), lambda i: (i, 0)),
        compiler_params=pltpu.CompilerParams(
            dimension_semantics=("parallel",),
            vmem_limit_bytes=vmem_limit,
        ),
        cost_estimate=cost,
    )(*args)

    out = out.reshape(B, M, C)

    # mask unfold + max over window (tiny; plain JAX)
    if has_mask:
        key_padding_mask = key_padding_mask.reshape(B, M, window).max(axis=-1)
    return out, key_padding_mask


def _reference(x, key_padding_mask, w, b, gamma, beta, window, compute_dtype=None):
    """Pure-JAX reference mirroring the PyTorch module (optionally with the
    same bf16 matmul-input cast as the kernel)."""
    B, N, C = x.shape
    if key_padding_mask is not None:
        x = jnp.where((key_padding_mask == -jnp.inf)[..., None], 0.0, x)
    padding = (window - N % window) % window
    x = jnp.pad(x, ((0, 0), (0, padding), (0, 0)))
    if key_padding_mask is not None:
        key_padding_mask = jnp.pad(
            key_padding_mask, ((0, 0), (0, padding)), constant_values=-jnp.inf
        )
    M = (N + padding) // window
    merged = x.reshape(B, M, window, C).transpose(0, 1, 3, 2).reshape(B, M, C * window)
    wt = w.T
    if compute_dtype is not None:
        merged = merged.astype(compute_dtype)
        wt = wt.astype(compute_dtype)
    y = jnp.dot(merged, wt, preferred_element_type=jnp.float32) + b
    mean = jnp.mean(y, axis=-1, keepdims=True)
    var = jnp.mean((y - mean) ** 2, axis=-1, keepdims=True)
    y = (y - mean) * jax.lax.rsqrt(var + LN_EPS) * gamma + beta
    if key_padding_mask is not None:
        key_padding_mask = key_padding_mask.reshape(B, M, window).max(axis=-1)
    return y, key_padding_mask


if __name__ == "__main__":
    B, N, C, window = 2, 9, 128, 2  # N=9 exercises the padding path; C=128 lane-dense

    key = jax.random.PRNGKey(0)
    kx, km, kw, kb, kg, kbe = jax.random.split(key, 6)

    x = jax.random.normal(kx, (B, N, C), dtype=jnp.float32)
    # key_padding_mask: 0 for valid tokens, -inf for masked tokens
    mask_bool = jax.random.bernoulli(km, p=0.25, shape=(B, N))
    key_padding_mask = jnp.where(mask_bool, -jnp.inf, 0.0).astype(jnp.float32)

    # Deterministic parameter init (Linear(window*C, C) + LayerNorm(C))
    fan_in = window * C
    bound = 1.0 / math.sqrt(fan_in)
    w = jax.random.uniform(kw, (C, window * C), minval=-bound, maxval=bound,
                           dtype=jnp.float32)
    b = jax.random.uniform(kb, (C,), minval=-bound, maxval=bound, dtype=jnp.float32)
    gamma = 1.0 + 0.01 * jax.random.normal(kg, (C,), dtype=jnp.float32)
    beta = 0.01 * jax.random.normal(kbe, (C,), dtype=jnp.float32)

    # --- masked + padded path -------------------------------------------------
    out, out_mask = token_merging(x, key_padding_mask, w, b, gamma, beta, window)
    jax.block_until_ready(out)
    jax.block_until_ready(out_mask)

    M = math.ceil(N / window)
    assert out.shape == (B, M, C), out.shape
    assert out_mask.shape == (B, M), out_mask.shape

    # Tight check: reference fed the same bf16 matmul inputs (f32 accumulation).
    ref_bf, ref_mask = _reference(x, key_padding_mask, w, b, gamma, beta, window,
                                  compute_dtype=jnp.bfloat16)
    assert jnp.allclose(out, ref_bf, atol=2e-3, rtol=2e-3), \
        float(jnp.max(jnp.abs(out - ref_bf)))
    # Loose check against the full-f32 module semantics (bf16 MXU inputs).
    ref_f32, _ = _reference(x, key_padding_mask, w, b, gamma, beta, window)
    assert jnp.allclose(out, ref_f32, atol=5e-2, rtol=5e-2)
    assert jnp.array_equal(out_mask, ref_mask)

    # --- no-mask, no-padding path (x never touched outside the kernel) -------
    x2 = jax.random.normal(kx, (B, 8, C), dtype=jnp.float32)
    out2, out2_mask = token_merging(x2, None, w, b, gamma, beta, window)
    jax.block_until_ready(out2)
    assert out2_mask is None
    ref2_bf, _ = _reference(x2, None, w, b, gamma, beta, window,
                            compute_dtype=jnp.bfloat16)
    assert out2.shape == (B, 4, C)
    assert jnp.allclose(out2, ref2_bf, atol=2e-3, rtol=2e-3)

    print("KERNEL_OK")
</pallas_src>

<mosaic_0001>
module attributes {stable_mosaic.version = 11 : i64} {
  func.func @kernel(%arg0: i32, %arg1: memref<10x2xf32, #tpu.memory_space<vmem>>, %arg2: memref<10x256xf32, #tpu.memory_space<vmem>>, %arg3: memref<256x128xbf16, #tpu.memory_space<vmem>>, %arg4: memref<1x128xf32, #tpu.memory_space<vmem>>, %arg5: memref<1x128xf32, #tpu.memory_space<vmem>>, %arg6: memref<1x128xf32, #tpu.memory_space<vmem>>, %arg7: memref<10x128xf32, #tpu.memory_space<vmem>>) attributes {dimension_semantics = [#tpu.dimension_semantics<parallel>], iteration_bounds = array<i64: 1>, scalar_prefetch = 0 : i64, scratch_operands = 0 : i64, tpu.core_type = #tpu.core_type<tc>, window_params = [{transform_indices = @transform_0, window_bounds = array<i64: 10, 2>}, {transform_indices = @transform_1, window_bounds = array<i64: 10, 256>}, {pipeline_mode = #tpu.pipeline_mode<synchronous>, transform_indices = @transform_2, window_bounds = array<i64: 256, 128>}, {pipeline_mode = #tpu.pipeline_mode<synchronous>, transform_indices = @transform_3, window_bounds = array<i64: 1, 128>}, {pipeline_mode = #tpu.pipeline_mode<synchronous>, transform_indices = @transform_4, window_bounds = array<i64: 1, 128>}, {pipeline_mode = #tpu.pipeline_mode<synchronous>, transform_indices = @transform_5, window_bounds = array<i64: 1, 128>}, {transform_indices = @transform_6, window_bounds = array<i64: 10, 128>}]} {
    %c0 = arith.constant 0 : index
    %c0_0 = arith.constant 0 : index
    %0 = vector.load %arg2[%c0, %c0_0] : memref<10x256xf32, #tpu.memory_space<vmem>>, vector<10x256xf32>
    %c0_1 = arith.constant 0 : index
    %c0_2 = arith.constant 0 : index
    %1 = vector.load %arg1[%c0_1, %c0_2] : memref<10x2xf32, #tpu.memory_space<vmem>>, vector<10x2xf32>
    %2 = vector.extract_strided_slice %0 {offsets = [0, 0], sizes = [10, 128], strides = [1, 1]} : vector<10x256xf32> to vector<10x128xf32>
    %3 = vector.extract_strided_slice %1 {offsets = [0, 0], sizes = [10, 1], strides = [1, 1]} : vector<10x2xf32> to vector<10x1xf32>
    %4 = vector.broadcast %3 : vector<10x1xf32> to vector<10x128xf32>
    %5 = arith.mulf %2, %4 : vector<10x128xf32>
    %6 = vector.extract_strided_slice %0 {offsets = [0, 128], sizes = [10, 128], strides = [1, 1]} : vector<10x256xf32> to vector<10x128xf32>
    %7 = vector.extract_strided_slice %1 {offsets = [0, 1], sizes = [10, 1], strides = [1, 1]} : vector<10x2xf32> to vector<10x1xf32>
    %8 = vector.broadcast %7 : vector<10x1xf32> to vector<10x128xf32>
    %9 = arith.mulf %6, %8 : vector<10x128xf32>
    %10 = tpu.concatenate %5, %9 in 1 : vector<10x128xf32>, vector<10x128xf32> -> vector<10x256xf32>
    %11 = arith.truncf %10 : vector<10x256xf32> to vector<10x256xbf16>
    %c0_3 = arith.constant 0 : index
    %c0_4 = arith.constant 0 : index
    %12 = vector.load %arg3[%c0_3, %c0_4] : memref<256x128xbf16, #tpu.memory_space<vmem>>, vector<256x128xbf16>
    %cst = arith.constant dense<0.000000e+00> : vector<10x128xf32>
    %13 = tpu.matmul %11, %12, %cst {dimension_numbers = #tpu.dot_dimension_numbers<[1], [0], [0], [1], [0, 0, 1, 1], [], []>} : vector<10x256xbf16>, vector<256x128xbf16>, vector<10x128xf32> -> vector<10x128xf32>
    %c0_5 = arith.constant 0 : index
    %c0_6 = arith.constant 0 : index
    %14 = vector.load %arg4[%c0_5, %c0_6] : memref<1x128xf32, #tpu.memory_space<vmem>>, vector<1x128xf32>
    %15 = vector.broadcast %14 : vector<1x128xf32> to vector<10x128xf32>
    %16 = arith.addf %13, %15 : vector<10x128xf32>
    %cst_7 = arith.constant dense<0.000000e+00> : vector<10xf32>
    %17 = vector.multi_reduction <add>, %16, %cst_7 [1] : vector<10x128xf32> to vector<10xf32>
    %18 = vector.shape_cast %17 : vector<10xf32> to vector<10x1xf32>
    %cst_8 = arith.constant 7.812500e-03 : f32
    %19 = vector.broadcast %cst_8 : f32 to vector<10x1xf32>
    %20 = arith.mulf %18, %19 : vector<10x1xf32>
    %21 = vector.broadcast %20 : vector<10x1xf32> to vector<10x128xf32>
    %22 = arith.subf %16, %21 : vector<10x128xf32>
    %23 = arith.mulf %22, %22 : vector<10x128xf32>
    %cst_9 = arith.constant dense<0.000000e+00> : vector<10xf32>
    %24 = vector.multi_reduction <add>, %23, %cst_9 [1] : vector<10x128xf32> to vector<10xf32>
    %25 = vector.shape_cast %24 : vector<10xf32> to vector<10x1xf32>
    %cst_10 = arith.constant 7.812500e-03 : f32
    %26 = vector.broadcast %cst_10 : f32 to vector<10x1xf32>
    %27 = arith.mulf %25, %26 : vector<10x1xf32>
    %cst_11 = arith.constant 9.99999974E-6 : f32
    %28 = vector.broadcast %cst_11 : f32 to vector<10x1xf32>
    %29 = arith.addf %27, %28 : vector<10x1xf32>
    %30 = math.rsqrt %29 : vector<10x1xf32>
    %c0_12 = arith.constant 0 : index
    %c0_13 = arith.constant 0 : index
    %31 = vector.load %arg5[%c0_12, %c0_13] : memref<1x128xf32, #tpu.memory_space<vmem>>, vector<1x128xf32>
    %32 = vector.broadcast %30 : vector<10x1xf32> to vector<10x128xf32>
    %33 = vector.broadcast %31 : vector<1x128xf32> to vector<10x128xf32>
    %34 = arith.mulf %32, %33 : vector<10x128xf32>
    %35 = arith.mulf %22, %34 : vector<10x128xf32>
    %c0_14 = arith.constant 0 : index
    %c0_15 = arith.constant 0 : index
    %36 = vector.load %arg6[%c0_14, %c0_15] : memref<1x128xf32, #tpu.memory_space<vmem>>, vector<1x128xf32>
    %37 = vector.broadcast %36 : vector<1x128xf32> to vector<10x128xf32>
    %38 = arith.addf %35, %37 : vector<10x128xf32>
    %c0_16 = arith.constant 0 : index
    %c0_17 = arith.constant 0 : index
    %39 = vector.load %arg7[%c0_16, %c0_17] : memref<10x128xf32, #tpu.memory_space<vmem>>, vector<10x128xf32>
    tpu.vector_store %arg7[%c0_16, %c0_17], %38 {strides = array<i32>} : memref<10x128xf32, #tpu.memory_space<vmem>>, vector<10x128xf32>,
    return
  }
  func.func @transform_0(%arg0: i32) -> (i32, i32) {
    %c0_i32 = arith.constant 0 : i32
    %c0_i32_0 = arith.constant 0 : i32
    return %arg0, %c0_i32 : i32, i32
  }
  func.func @transform_1(%arg0: i32) -> (i32, i32) {
    %c0_i32 = arith.constant 0 : i32
    %c0_i32_0 = arith.constant 0 : i32
    return %arg0, %c0_i32 : i32, i32
  }
  func.func @transform_2(%arg0: i32) -> (i32, i32) {
    %c0_i32 = arith.constant 0 : i32
    %c0_i32_0 = arith.constant 0 : i32
    %c0_i32_1 = arith.constant 0 : i32
    return %c0_i32, %c0_i32_0 : i32, i32
  }
  func.func @transform_3(%arg0: i32) -> (i32, i32) {
    %c0_i32 = arith.constant 0 : i32
    %c0_i32_0 = arith.constant 0 : i32
    %c0_i32_1 = arith.constant 0 : i32
    return %c0_i32, %c0_i32_0 : i32, i32
  }
  func.func @transform_4(%arg0: i32) -> (i32, i32) {
    %c0_i32 = arith.constant 0 : i32
    %c0_i32_0 = arith.constant 0 : i32
    %c0_i32_1 = arith.constant 0 : i32
    return %c0_i32, %c0_i32_0 : i32, i32
  }
  func.func @transform_5(%arg0: i32) -> (i32, i32) {
    %c0_i32 = arith.constant 0 : i32
    %c0_i32_0 = arith.constant 0 : i32
    %c0_i32_1 = arith.constant 0 : i32
    return %c0_i32, %c0_i32_0 : i32, i32
  }
  func.func @transform_6(%arg0: i32) -> (i32, i32) {
    %c0_i32 = arith.constant 0 : i32
    %c0_i32_0 = arith.constant 0 : i32
    return %arg0, %c0_i32 : i32, i32
  }
}

</mosaic_0001>

<llo_original>
// kernel: tpu_custom_call.1
$region0: #{tpu_custom_call.1}
  #allocation0 [shape = 'u32[]', space=smem, size = 0x4, offset = 0x4, fixed_abs, tag = 'smem constant byte address 0x4 - core index']
  #allocation1 [shape = 'u32[144,128]{1,0:T(1,128)}', space=vmem, size = 0x12000, scoped, tag = 'internal scratch']
  %s0 = inlined_call_operand.vmem [shape: f32[10,2], index: 0, kind: input, shape index: {}]
  %s1 = inlined_call_operand.hbm [shape: f32[10,256], index: 1, kind: input, shape index: {}]
  %s2 = inlined_call_operand.hbm [shape: bf16[256,128], index: 2, kind: input, shape index: {}]
  %s3 = inlined_call_operand.vmem [shape: f32[1,128], index: 3, kind: input, shape index: {}]
  %s4 = inlined_call_operand.vmem [shape: f32[1,128], index: 4, kind: input, shape index: {}]
  %s5 = inlined_call_operand.vmem [shape: f32[1,128], index: 5, kind: input, shape index: {}]
  %s6 = inlined_call_operand.hbm [shape: f32[10,128], index: 6, kind: output, shape index: {}]
  %s7 = sld [smem:[#allocation0]]
  $region42: #{tpu_custom_call.1} parent=0
    _
  %s9 = ssub.s32 1, %s7
  %s10 = scalar_select 0, %s9, %s7
  $region1: #{tpu_custom_call.1} parent=0
    #allocation2 [shape = 'u8[16384]{0}', space=vmem, size = 0x4000, scoped, tag = 'input window, operand 1, single buffered']
    #allocation3 [shape = 's32[1]{0}', space=sflag, size = 0x4, scoped, tag = 'scoped memory for tpu_custom_call.1']
    #allocation4 [shape = 's32[1]{0}', space=sflag, size = 0x4, scoped, tag = 'scoped memory for tpu_custom_call.1']
    #allocation5 [shape = 'u8[65536]{0}', space=vmem, size = 0x10000, scoped, tag = 'input window, operand 2, single buffered']
    #allocation6 [shape = 's32[1]{0}', space=sflag, size = 0x4, scoped, tag = 'scoped memory for tpu_custom_call.1']
    #allocation7 [shape = 'u8[8192]{0}', space=vmem, size = 0x2000, scoped, tag = 'output window, operand 0, single buffered']
    %11 = vsyncpa [#allocation3], 0
    %12 = vsyncpa [#allocation6], 0
    %13 = vsyncpa [#allocation4], 0
    // Predicated region
    $region2: #{tpu_custom_call.1} parent=1 // pred_check
      _
    $region3: #{tpu_custom_call.1} parent=1 // pred_check_branch
      %15 = sbr.rel (0) target = $region5
    $region4: #{tpu_custom_call.1} parent=1 // pred_region
      _
    $region5: #{tpu_custom_call.1} parent=1 // pred_fallthru
      _
    // Predicated region
    $region6: #{tpu_custom_call.1} parent=1 // pred_check
      _
    $region7: #{tpu_custom_call.1} parent=1 // pred_check_branch
      %17 = sbr.rel (0) target = $region9
    $region8: #{tpu_custom_call.1} parent=1 // pred_region
      %s19 = ssub.s32 512, 512
      %20 = vsyncadd [#allocation3], %s19
      %s21 = sshll.u32 [#allocation2], 4
      %s22 = int_to_ptr.vmem [resolvable:$true] %s21
      %27 = dma.hbm_to_vmem [thread:$0]  %s1, 512, %s22, [#allocation3], 256, 256, 16
    $region9: #{tpu_custom_call.1} parent=1 // pred_fallthru
      _
    // Predicated region
    $region10: #{tpu_custom_call.1} parent=1 // pred_check
      _
    $region11: #{tpu_custom_call.1} parent=1 // pred_check_branch
      %29 = sbr.rel (0) target = $region13
    $region12: #{tpu_custom_call.1} parent=1 // pred_region
      %s31 = ssub.s32 2048, 2048
      %32 = vsyncadd [#allocation6], %s31
      %s33 = sshll.u32 [#allocation5], 4
      %s34 = int_to_ptr.vmem [resolvable:$true] %s33
      %39 = dma.hbm_to_vmem [thread:$0]  %s2, 2048, %s34, [#allocation6], 64, 64, 4
    $region13: #{tpu_custom_call.1} parent=1 // pred_fallthru
      _
    // Predicated region
    $region14: #{tpu_custom_call.1} parent=1 // pred_check
      _
    $region15: #{tpu_custom_call.1} parent=1 // pred_check_branch
      %41 = sbr.rel (0) target = $region17
    $region16: #{tpu_custom_call.1} parent=1 // pred_region
      _
    $region17: #{tpu_custom_call.1} parent=1 // pred_fallthru
      _
    // Predicated region
    $region18: #{tpu_custom_call.1} parent=1 // pred_check
      _
    $region19: #{tpu_custom_call.1} parent=1 // pred_check_branch
      %43 = sbr.rel (0) target = $region21
    $region20: #{tpu_custom_call.1} parent=1 // pred_region
      _
    $region21: #{tpu_custom_call.1} parent=1 // pred_fallthru
      _
    // Predicated region
    $region22: #{tpu_custom_call.1} parent=1 // pred_check
      _
    $region23: #{tpu_custom_call.1} parent=1 // pred_check_branch
      %45 = sbr.rel (0) target = $region25
    $region24: #{tpu_custom_call.1} parent=1 // pred_region
      _
    $region25: #{tpu_custom_call.1} parent=1 // pred_fallthru
      _
    // Predicated region
    $region26: #{tpu_custom_call.1} parent=1 // pred_check
      _
    $region27: #{tpu_custom_call.1} parent=1 // pred_check_branch
      %47 = sbr.rel (0) target = $region29
    $region28: #{tpu_custom_call.1} parent=1 // pred_region
      %48 = dma.done [#allocation3], 512
    $region29: #{tpu_custom_call.1} parent=1 // pred_fallthru
      _
    // Predicated region
    $region30: #{tpu_custom_call.1} parent=1 // pred_check
      _
    $region31: #{tpu_custom_call.1} parent=1 // pred_check_branch
      %50 = sbr.rel (0) target = $region33
    $region32: #{tpu_custom_call.1} parent=1 // pred_region
      %51 = dma.done [#allocation6], 2048
    $region33: #{tpu_custom_call.1} parent=1 // pred_fallthru
      _
    %v53 = vld [vmem:[#allocation2] sm:$0xff]
    %v54 = vld [vmem:[#allocation2 + $0x8] sm:$0xff]
    %v55 = vld [vmem:[#allocation2 + $0x10] sm:$0x3]
    %v56 = vld [vmem:[#allocation2 + $0x18] sm:$0x3]
    %v57 = vld [vmem:[%s0] sm:$0xff]
    %v58 = vld [vmem:[%s0 + $0x8] sm:$0x3]
    %60 = vset.pattern.permute.xlu0 0
    %61 = vperm.xlu0 %60, %v57
    %v62 = vpop.permute.xlu0 %61
    %65 = vset.pattern.permute.xlu0 0
    %66 = vperm.xlu0 %65, %v58
    %v67 = vpop.permute.xlu0 %66
    %v69 = vmul.f32 %v53, %v62
    %v70 = vmul.f32 %v55, %v67
    %71 = vset.pattern.permute.xlu0 1
    %72 = vperm.xlu0 %71, %v57
    %v73 = vpop.permute.xlu0 %72
    %75 = vset.pattern.permute.xlu0 1
    %76 = vperm.xlu0 %75, %v58
    %v77 = vpop.permute.xlu0 %76
    %v79 = vmul.f32 %v54, %v73
    %v80 = vmul.f32 %v56, %v77
    %v81 = vpack.c.bf16 %v70, %v69
    %v82 = vpack.c.bf16 %v80, %v79
    %v83 = vld [vmem:[#allocation5] sm:$0xf]
    %v84 = vld [vmem:[#allocation5 + $0x4] sm:$0xf]
    %v85 = vld [vmem:[#allocation5 + $0x8] sm:$0xf]
    %v86 = vld [vmem:[#allocation5 + $0xc] sm:$0xf]
    %v87 = vld [vmem:[#allocation5 + $0x10] sm:$0xf]
    %v88 = vld [vmem:[#allocation5 + $0x14] sm:$0xf]
    %v89 = vld [vmem:[#allocation5 + $0x18] sm:$0xf]
    %v90 = vld [vmem:[#allocation5 + $0x1c] sm:$0xf]
    %v91 = vld [vmem:[#allocation5 + $0x20] sm:$0xf]
    %v92 = vld [vmem:[#allocation5 + $0x24] sm:$0xf]
    %v93 = vld [vmem:[#allocation5 + $0x28] sm:$0xf]
    %v94 = vld [vmem:[#allocation5 + $0x2c] sm:$0xf]
    %v95 = vld [vmem:[#allocation5 + $0x30] sm:$0xf]
    %v96 = vld [vmem:[#allocation5 + $0x34] sm:$0xf]
    %v97 = vld [vmem:[#allocation5 + $0x38] sm:$0xf]
    %v98 = vld [vmem:[#allocation5 + $0x3c] sm:$0xf]
    %v99 = vld [vmem:[#allocation5 + $0x40] sm:$0xf]
    %v100 = vld [vmem:[#allocation5 + $0x44] sm:$0xf]
    %v101 = vld [vmem:[#allocation5 + $0x48] sm:$0xf]
    %v102 = vld [vmem:[#allocation5 + $0x4c] sm:$0xf]
    %v103 = vld [vmem:[#allocation5 + $0x50] sm:$0xf]
    %v104 = vld [vmem:[#allocation5 + $0x54] sm:$0xf]
    %v105 = vld [vmem:[#allocation5 + $0x58] sm:$0xf]
    %v106 = vld [vmem:[#allocation5 + $0x5c] sm:$0xf]
    %v107 = vld [vmem:[#allocation5 + $0x60] sm:$0xf]
    %v108 = vld [vmem:[#allocation5 + $0x64] sm:$0xf]
    %v109 = vld [vmem:[#allocation5 + $0x68] sm:$0xf]
    %v110 = vld [vmem:[#allocation5 + $0x6c] sm:$0xf]
    %v111 = vld [vmem:[#allocation5 + $0x70] sm:$0xf]
    %v112 = vld [vmem:[#allocation5 + $0x74] sm:$0xf]
    %v113 = vld [vmem:[#allocation5 + $0x78] sm:$0xf]
    %v114 = vld [vmem:[#allocation5 + $0x7c] sm:$0xf]
    %v115 = vld [vmem:[%s3] sm:$0x1]
    %v117 = vlaneseq
    %v118 = vshrl.u32 %v117, 7
    %v119 = vsub.s32 0, %v118
    %v120 = vrot.slane %v115, %v119
    %v154 = vunpack.c.l.b16 %v83
    %v155 = vunpack.c.l.b16 %v84
    %v156 = vunpack.c.l.b16 %v85
    %v157 = vunpack.c.l.b16 %v86
    %v158 = vunpack.c.l.b16 %v87
    %v159 = vunpack.c.l.b16 %v88
    %v160 = vunpack.c.l.b16 %v89
    %v161 = vunpack.c.l.b16 %v90
    %v162 = vunpack.c.l.b16 %v91
    %v163 = vunpack.c.l.b16 %v92
    %v164 = vunpack.c.l.b16 %v93
    %v165 = vunpack.c.l.b16 %v94
    %v166 = vunpack.c.l.b16 %v95
    %v167 = vunpack.c.l.b16 %v96
    %v168 = vunpack.c.l.b16 %v97
    %v169 = vunpack.c.l.b16 %v98
    %v170 = vunpack.c.l.b16 %v99
    %v171 = vunpack.c.l.b16 %v100
    %v172 = vunpack.c.l.b16 %v101
    %v173 = vunpack.c.l.b16 %v102
    %v174 = vunpack.c.l.b16 %v103
    %v175 = vunpack.c.l.b16 %v104
    %v176 = vunpack.c.l.b16 %v105
    %v177 = vunpack.c.l.b16 %v106
    %v178 = vunpack.c.l.b16 %v107
    %v179 = vunpack.c.l.b16 %v108
    %v180 = vunpack.c.l.b16 %v109
    %v181 = vunpack.c.l.b16 %v110
    %v182 = vunpack.c.l.b16 %v111
    %v183 = vunpack.c.l.b16 %v112
    %v184 = vunpack.c.l.b16 %v113
    %v185 = vunpack.c.l.b16 %v114
    %v186 = vpack.c.b16 %v155, %v154
    %v187 = vpack.c.b16 %v157, %v156
    %v188 = vpack.c.b16 %v159, %v158
    %v189 = vpack.c.b16 %v161, %v160
    %v190 = vpack.c.b16 %v163, %v162
    %v191 = vpack.c.b16 %v165, %v164
    %v192 = vpack.c.b16 %v167, %v166
    %v193 = vpack.c.b16 %v169, %v168
    %v194 = vpack.c.b16 %v171, %v170
    %v195 = vpack.c.b16 %v173, %v172
    %v196 = vpack.c.b16 %v175, %v174
    %v197 = vpack.c.b16 %v177, %v176
    %v198 = vpack.c.b16 %v179, %v178
    %v199 = vpack.c.b16 %v181, %v180
    %v200 = vpack.c.b16 %v183, %v182
    %v201 = vpack.c.b16 %v185, %v184
    %218 = vmatprep.subr.bf16.mxu0 0
    %219 = vmatpush1.bf16.msra.mxu0 %v186
    %220 = vmatprep.subr.bf16.mxu0 0
    %221 = vmatpush1.bf16.msra.mxu0 %v187
    %222 = vmatprep.subr.bf16.mxu0 0
    %223 = vmatpush1.bf16.msra.mxu0 %v188
    %224 = vmatprep.subr.bf16.mxu0 0
    %225 = vmatpush1.bf16.msra.mxu0 %v189
    %226 = vmatprep.subr.bf16.mxu0 0
    %227 = vmatpush1.bf16.msra.mxu0 %v190
    %228 = vmatprep.subr.bf16.mxu0 0
    %229 = vmatpush1.bf16.msra.mxu0 %v191
    %230 = vmatprep.subr.bf16.mxu0 0
    %231 = vmatpush1.bf16.msra.mxu0 %v192
    %232 = vmatprep.subr.bf16.mxu0 0
    %233 = vmatpush1.bf16.msra.mxu0 %v193
    %234 = vmatprep.subr.bf16.mxu0 0
    %235 = vmatpush1.bf16.msra.mxu0 %v194
    %236 = vmatprep.subr.bf16.mxu0 0
    %237 = vmatpush1.bf16.msra.mxu0 %v195
    %238 = vmatprep.subr.bf16.mxu0 0
    %239 = vmatpush1.bf16.msra.mxu0 %v196
    %240 = vmatprep.subr.bf16.mxu0 0
    %241 = vmatpush1.bf16.msra.mxu0 %v197
    %242 = vmatprep.subr.bf16.mxu0 0
    %243 = vmatpush1.bf16.msra.mxu0 %v198
    %244 = vmatprep.subr.bf16.mxu0 0
    %245 = vmatpush1.bf16.msra.mxu0 %v199
    %246 = vmatprep.subr.bf16.mxu0 0
    %247 = vmatpush1.bf16.msra.mxu0 %v200
    %248 = vmatprep.subr.bf16.mxu0 0
    %249 = vmatpush1.bf16.msra.mxu0 %v201
    %250 = vmatprep.mubr.bf16.mxu0 %v82
    %251 = vmatmul.mubr.bf16.gmra.mrb[0].mxu0 %v81
    %v252 = vpop.f32.mrb[0].mxu0
    %v253 = vadd.f32 %v120, %v252
    %v254 = vpop.f32.mrb[0].mxu0
    %v255 = vpop.f32.mrb[0].mxu0
    %v256 = vadd.f32 %v120, %v255
    %v257 = vpop.f32.mrb[0].mxu0
    %258 = vdwg.mxu0
    %259 = vadd.xlane.f32.xlu0 %v253
    %v260 = vpop.xlane.xlu0 %259
    %vm261 = vcmask 1041408
    %v262 = vsel %vm261, %v256, 0.0
    %263 = vadd.xlane.f32.xlu0 %v262
    %v264 = vpop.xlane.xlu0 %263
    %v265 = vmul.f32 %v260, 0.0078125
    %v266 = vmul.f32 %v264, 0.0078125
    %v267 = vsub.f32 %v253, %v265
    %v268 = vsub.f32 %v256, %v266
    %v269 = vmul.f32 %v267, %v267
    %v270 = vmul.f32 %v268, %v268
    %271 = vadd.xlane.f32.xlu0 %v269
    %v272 = vpop.xlane.xlu0 %271
    %v273 = vsel %vm261, %v270, 0.0
    %274 = vadd.xlane.f32.xlu0 %v273
    %v275 = vpop.xlane.xlu0 %274
    %v276 = vmul.f32 %v272, 0.0078125
    %v277 = vmul.f32 %v275, 0.0078125
    %v278 = vadd.f32 %v276, 1e-05
    %v279 = vadd.f32 %v277, 1e-05
    %v280 = vrsqrt.pop %v278
    %v281 = vrsqrt.pop %v279
    %v282 = vld [vmem:[%s4] sm:$0x1]
    %v284 = vlaneseq
    %v285 = vshrl.u32 %v284, 7
    %v286 = vsub.s32 0, %v285
    %v287 = vrot.slane %v282, %v286
    %v289 = vmul.f32 %v280, %v287
    %v290 = vmul.f32 %v281, %v287
    %v291 = vmul.f32 %v267, %v289
    %v292 = vmul.f32 %v268, %v290
    %v293 = vld [vmem:[%s5] sm:$0x1]
    %v295 = vlaneseq
    %v296 = vshrl.u32 %v295, 7
    %v297 = vsub.s32 0, %v296
    %v298 = vrot.slane %v293, %v297
    %v300 = vadd.f32 %v291, %v298
    %v301 = vadd.f32 %v292, %v298
    %302 = vst [vmem:[#allocation7] sm:$0xff] %v300
    %303 = vst [vmem:[#allocation7 + $0x8] sm:$0x3] %v301
    // Predicated region
    $region34: #{tpu_custom_call.1} parent=1 // pred_check
      _
    $region35: #{tpu_custom_call.1} parent=1 // pred_check_branch
      %305 = sbr.rel (0) target = $region37
    $region36: #{tpu_custom_call.1} parent=1 // pred_region
      %s307 = ssub.s32 256, 256
      %308 = vsyncadd [#allocation4], %s307
      %s309 = sshll.u32 [#allocation7], 4
      %s310 = int_to_ptr.vmem [resolvable:$true] %s309
      %315 = dma.vmem_to_hbm [thread:$0]  %s310, 256, %s6, [#allocation4], 128, 128, 8
    $region37: #{tpu_custom_call.1} parent=1 // pred_fallthru
      _
    // Predicated region
    $region38: #{tpu_custom_call.1} parent=1 // pred_check
      _
    $region39: #{tpu_custom_call.1} parent=1 // pred_check_branch
      %317 = sbr.rel (0) target = $region41
    $region40: #{tpu_custom_call.1} parent=1 // pred_region
      %318 = dma.done [#allocation4], 256
    $region41: #{tpu_custom_call.1} parent=1 // pred_fallthru
      _
    %319 = vsyncpa [#allocation3], 1
    %320 = vsyncpa [#allocation6], 1
    %321 = vsyncpa [#allocation4], 1

</llo_original>
